<compile_context>
chip_gen: v6e
topology: v6e:2x2x1
jax: 0.10.0
libtpu: 0.0.40
codegen_flags: <defaults>
</compile_context>

<pallas_src>
import math

import jax
import jax.numpy as jnp
from jax.experimental import pallas as pl
from jax.experimental.pallas import tpu as pltpu


def _erf_poly(x):
    """Abramowitz-Stegun 7.1.26 erf approximation (|err| <= 1.5e-7), f32.

    Uses only exp / mul / add / div / select so it always lowers on Mosaic
    (no erf primitive required)."""
    a1 = jnp.float32(0.254829592)
    a2 = jnp.float32(-0.284496736)
    a3 = jnp.float32(1.421413741)
    a4 = jnp.float32(-1.453152027)
    a5 = jnp.float32(1.061405429)
    p = jnp.float32(0.3275911)
    ax = jnp.abs(x)
    t = 1.0 / (1.0 + p * ax)
    poly = ((((a5 * t + a4) * t + a3) * t + a2) * t + a1) * t
    y = 1.0 - poly * jnp.exp(-ax * ax)
    return jnp.where(x >= 0, y, -y)


def _gelu_exact(h):
    """Exact (erf-based) GELU == torch.nn.GELU() default, computed in f32."""
    return 0.5 * h * (1.0 + _erf_poly(h * jnp.float32(1.0 / math.sqrt(2.0))))


def mixer_kernel(xT_ref, w1_ref, b1_ref, w2_ref, b2_ref, oT_ref):
    # xT_ref: (mlp_dim, TM)      one lane-tile of x^T (M on lanes)
    # w1_ref: (hidden, mlp_dim)  dense_1 weight (VMEM-resident across grid)
    # b1_ref: (hidden, 1)        dense_1 bias   (f32, resident)
    # w2_ref: (mlp_dim, hidden)  dense_2 weight (resident)
    # b2_ref: (mlp_dim, 1)       dense_2 bias   (f32, resident)
    # oT_ref: (mlp_dim, TM)      one lane-tile of out^T
    xT = xT_ref[...]

    # dense_1: h^T = W1 @ x^T + b1   (MXU, f32 accumulation)
    h = jnp.dot(w1_ref[...], xT, preferred_element_type=jnp.float32) + b1_ref[...]

    # exact GELU in f32 on the accumulator
    h = _gelu_exact(h)

    # dense_2: out^T = W2 @ h^T + b2
    o = jnp.dot(w2_ref[...], h.astype(w2_ref.dtype),
                preferred_element_type=jnp.float32) + b2_ref[...]
    oT_ref[...] = o.astype(oT_ref.dtype)


def _pick_tile_m(mlp_dim, hidden_dim, tile_m):
    """Lane-tile size: multiple of 128, double-buffered slabs under ~12 MiB."""
    budget = 12 * 1024 * 1024           # headroom under v5e's 16 MiB scoped VMEM
    tm = max(128, (tile_m // 128) * 128)
    while tm > 128 and 2 * (mlp_dim + hidden_dim) * tm * 4 > budget:
        tm //= 2
    return tm


def mixer_block(x, w1, b1, w2, b2, *, compute_dtype=jnp.float32, tile_m=1024):
    """x: (..., mlp_dim) -> (..., mlp_dim).  w1: (hidden, mlp), w2: (mlp, hidden)."""
    orig_shape = x.shape
    mlp_dim = int(orig_shape[-1])
    hidden_dim = int(w1.shape[0])
    M = 1
    for d in orig_shape[:-1]:
        M *= int(d)

    # Feature-major layout: the flattened batch M goes on the 128-lane axis.
    xT = jnp.transpose(x.reshape(M, mlp_dim))            # (mlp_dim, M)

    if M <= tile_m:
        tm, Mp = M, M                                     # single full block
    else:
        tm = _pick_tile_m(mlp_dim, hidden_dim, tile_m)
        Mp = pl.cdiv(M, tm) * tm
        if Mp != M:
            xT = jnp.pad(xT, ((0, 0), (0, Mp - M)))       # columns independent

    outT = pl.pallas_call(
        mixer_kernel,
        out_shape=jax.ShapeDtypeStruct((mlp_dim, Mp), jnp.float32),
        grid=(Mp // tm,),
        in_specs=[
            pl.BlockSpec((mlp_dim, tm), lambda i: (0, i)),          # x^T tile
            pl.BlockSpec((hidden_dim, mlp_dim), lambda i: (0, 0)),  # W1 (resident)
            pl.BlockSpec((hidden_dim, 1), lambda i: (0, 0)),        # b1 (resident)
            pl.BlockSpec((mlp_dim, hidden_dim), lambda i: (0, 0)),  # W2 (resident)
            pl.BlockSpec((mlp_dim, 1), lambda i: (0, 0)),           # b2 (resident)
        ],
        out_specs=pl.BlockSpec((mlp_dim, tm), lambda i: (0, i)),
        compiler_params=pltpu.CompilerParams(
            dimension_semantics=("parallel",)),
    )(
        xT.astype(compute_dtype),
        w1.astype(compute_dtype),
        b1.reshape(hidden_dim, 1).astype(jnp.float32),
        w2.astype(compute_dtype),
        b2.reshape(mlp_dim, 1).astype(jnp.float32),
    )

    return jnp.transpose(outT[:, :M]).reshape(orig_shape)


def mixer_block_ref(x, w1, b1, w2, b2):
    """Pure-JAX reference of the PyTorch forward (dropout=0.0), exact erf GELU."""
    h = jnp.einsum("...i,oi->...o", x, w1) + b1
    h = 0.5 * h * (1.0 + jax.lax.erf(h * jnp.float32(1.0 / math.sqrt(2.0))))
    return jnp.einsum("...i,oi->...o", h, w2) + b2


def make_linear_params(key, in_dim, out_dim):
    """Mimics torch.nn.Linear init: U(-1/sqrt(in_dim), 1/sqrt(in_dim))."""
    kw, kb = jax.random.split(key)
    bound = 1.0 / math.sqrt(in_dim)
    w = jax.random.uniform(kw, (out_dim, in_dim), minval=-bound, maxval=bound,
                           dtype=jnp.float32)
    b = jax.random.uniform(kb, (out_dim,), minval=-bound, maxval=bound,
                           dtype=jnp.float32)
    return w, b


if __name__ == "__main__":
    # Small shapes consistent with the module: (batch=2, channels=4, mlp_dim=16),
    # hidden_dim=32.
    B, C = 2, 4
    mlp_dim, hidden_dim = 16, 32
    key = jax.random.PRNGKey(0)
    kx, k1, k2 = jax.random.split(key, 3)

    x = jax.random.normal(kx, (B, C, mlp_dim), dtype=jnp.float32)
    w1, b1 = make_linear_params(k1, mlp_dim, hidden_dim)   # dense_1
    w2, b2 = make_linear_params(k2, hidden_dim, mlp_dim)   # dense_2

    ref = mixer_block_ref(x, w1, b1, w2, b2)

    # f32 path (correctness gate; poly-erf |err| ~1.5e-7 + f32 accumulation order)
    out = jax.block_until_ready(mixer_block(x, w1, b1, w2, b2))
    assert out.shape == (B, C, mlp_dim)
    assert jnp.allclose(out, ref, atol=1e-4, rtol=1e-4), "f32 mismatch vs reference"

    # Multi-tile / padded-grid path (M=300 rows, tile_m=128 -> 3 grid steps)
    x_big = jax.random.normal(kx, (2, 150, mlp_dim), dtype=jnp.float32)
    ref_big = mixer_block_ref(x_big, w1, b1, w2, b2)
    out_big = jax.block_until_ready(mixer_block(x_big, w1, b1, w2, b2, tile_m=128))
    assert jnp.allclose(out_big, ref_big, atol=1e-4, rtol=1e-4), \
        "tiled-path mismatch vs reference"

    # bf16 fast path (HBM-bandwidth lever); looser tolerance for bf16 inputs
    out_bf16 = jax.block_until_ready(
        mixer_block(x, w1, b1, w2, b2, compute_dtype=jnp.bfloat16))
    assert jnp.allclose(out_bf16, ref, atol=5e-2, rtol=5e-2), \
        "bf16 mismatch vs reference"

    print("KERNEL_OK")
</pallas_src>

<mosaic_0001>
module attributes {stable_mosaic.version = 11 : i64} {
  func.func @mixer_kernel(%arg0: i32, %arg1: memref<16x8xf32, #tpu.memory_space<vmem>>, %arg2: memref<32x16xf32, #tpu.memory_space<vmem>>, %arg3: memref<32x1xf32, #tpu.memory_space<vmem>>, %arg4: memref<16x32xf32, #tpu.memory_space<vmem>>, %arg5: memref<16x1xf32, #tpu.memory_space<vmem>>, %arg6: memref<16x8xf32, #tpu.memory_space<vmem>>) attributes {dimension_semantics = [#tpu.dimension_semantics<parallel>], iteration_bounds = array<i64: 1>, scalar_prefetch = 0 : i64, scratch_operands = 0 : i64, tpu.core_type = #tpu.core_type<tc>, window_params = [{transform_indices = @transform_0, window_bounds = array<i64: 16, 8>}, {pipeline_mode = #tpu.pipeline_mode<synchronous>, transform_indices = @transform_1, window_bounds = array<i64: 32, 16>}, {pipeline_mode = #tpu.pipeline_mode<synchronous>, transform_indices = @transform_2, window_bounds = array<i64: 32, 1>}, {pipeline_mode = #tpu.pipeline_mode<synchronous>, transform_indices = @transform_3, window_bounds = array<i64: 16, 32>}, {pipeline_mode = #tpu.pipeline_mode<synchronous>, transform_indices = @transform_4, window_bounds = array<i64: 16, 1>}, {transform_indices = @transform_5, window_bounds = array<i64: 16, 8>}]} {
    %c0 = arith.constant 0 : index
    %c0_0 = arith.constant 0 : index
    %0 = vector.load %arg1[%c0, %c0_0] : memref<16x8xf32, #tpu.memory_space<vmem>>, vector<16x8xf32>
    %c0_1 = arith.constant 0 : index
    %c0_2 = arith.constant 0 : index
    %1 = vector.load %arg2[%c0_1, %c0_2] : memref<32x16xf32, #tpu.memory_space<vmem>>, vector<32x16xf32>
    %cst = arith.constant dense<0.000000e+00> : vector<32x8xf32>
    %2 = tpu.matmul %1, %0, %cst {dimension_numbers = #tpu.dot_dimension_numbers<[1], [0], [0], [1], [0, 0, 1, 1], [], []>} : vector<32x16xf32>, vector<16x8xf32>, vector<32x8xf32> -> vector<32x8xf32>
    %c0_3 = arith.constant 0 : index
    %c0_4 = arith.constant 0 : index
    %3 = vector.load %arg3[%c0_3, %c0_4] : memref<32x1xf32, #tpu.memory_space<vmem>>, vector<32x1xf32>
    %4 = vector.broadcast %3 : vector<32x1xf32> to vector<32x8xf32>
    %5 = arith.addf %2, %4 : vector<32x8xf32>
    %cst_5 = arith.constant 5.000000e-01 : f32
    %6 = vector.broadcast %cst_5 : f32 to vector<32x8xf32>
    %7 = arith.mulf %6, %5 : vector<32x8xf32>
    %cst_6 = arith.constant 0.707106769 : f32
    %8 = vector.broadcast %cst_6 : f32 to vector<32x8xf32>
    %9 = arith.mulf %5, %8 : vector<32x8xf32>
    %10 = math.absf %9 : vector<32x8xf32>
    %cst_7 = arith.constant 0.327591091 : f32
    %11 = vector.broadcast %cst_7 : f32 to vector<32x8xf32>
    %12 = arith.mulf %11, %10 : vector<32x8xf32>
    %cst_8 = arith.constant 1.000000e+00 : f32
    %13 = vector.broadcast %cst_8 : f32 to vector<32x8xf32>
    %14 = arith.addf %13, %12 : vector<32x8xf32>
    %cst_9 = arith.constant 1.000000e+00 : f32
    %15 = vector.broadcast %cst_9 : f32 to vector<32x8xf32>
    %16 = arith.divf %15, %14 : vector<32x8xf32>
    %cst_10 = arith.constant 1.06140542 : f32
    %17 = vector.broadcast %cst_10 : f32 to vector<32x8xf32>
    %18 = arith.mulf %17, %16 : vector<32x8xf32>
    %cst_11 = arith.constant -1.45315206 : f32
    %19 = vector.broadcast %cst_11 : f32 to vector<32x8xf32>
    %20 = arith.addf %18, %19 : vector<32x8xf32>
    %21 = arith.mulf %20, %16 : vector<32x8xf32>
    %cst_12 = arith.constant 1.42141378 : f32
    %22 = vector.broadcast %cst_12 : f32 to vector<32x8xf32>
    %23 = arith.addf %21, %22 : vector<32x8xf32>
    %24 = arith.mulf %23, %16 : vector<32x8xf32>
    %cst_13 = arith.constant -0.284496725 : f32
    %25 = vector.broadcast %cst_13 : f32 to vector<32x8xf32>
    %26 = arith.addf %24, %25 : vector<32x8xf32>
    %27 = arith.mulf %26, %16 : vector<32x8xf32>
    %cst_14 = arith.constant 0.254829586 : f32
    %28 = vector.broadcast %cst_14 : f32 to vector<32x8xf32>
    %29 = arith.addf %27, %28 : vector<32x8xf32>
    %30 = arith.mulf %29, %16 : vector<32x8xf32>
    %cst_15 = arith.constant 0.000000e+00 : f32
    %31 = vector.broadcast %cst_15 : f32 to vector<32x8xf32>
    %32 = arith.subf %31, %10 : vector<32x8xf32>
    %33 = arith.mulf %32, %10 : vector<32x8xf32>
    %34 = math.exp %33 : vector<32x8xf32>
    %35 = arith.mulf %30, %34 : vector<32x8xf32>
    %cst_16 = arith.constant 1.000000e+00 : f32
    %36 = vector.broadcast %cst_16 : f32 to vector<32x8xf32>
    %37 = arith.subf %36, %35 : vector<32x8xf32>
    %cst_17 = arith.constant 0.000000e+00 : f32
    %38 = vector.broadcast %cst_17 : f32 to vector<32x8xf32>
    %39 = arith.cmpf oge, %9, %38 : vector<32x8xf32>
    %cst_18 = arith.constant 0.000000e+00 : f32
    %40 = vector.broadcast %cst_18 : f32 to vector<32x8xf32>
    %41 = arith.subf %40, %37 : vector<32x8xf32>
    %42 = arith.select %39, %37, %41 : vector<32x8xi1>, vector<32x8xf32>
    %cst_19 = arith.constant 1.000000e+00 : f32
    %43 = vector.broadcast %cst_19 : f32 to vector<32x8xf32>
    %44 = arith.addf %43, %42 : vector<32x8xf32>
    %45 = arith.mulf %7, %44 : vector<32x8xf32>
    %c0_20 = arith.constant 0 : index
    %c0_21 = arith.constant 0 : index
    %46 = vector.load %arg4[%c0_20, %c0_21] : memref<16x32xf32, #tpu.memory_space<vmem>>, vector<16x32xf32>
    %cst_22 = arith.constant dense<0.000000e+00> : vector<16x8xf32>
    %47 = tpu.matmul %46, %45, %cst_22 {dimension_numbers = #tpu.dot_dimension_numbers<[1], [0], [0], [1], [0, 0, 1, 1], [], []>} : vector<16x32xf32>, vector<32x8xf32>, vector<16x8xf32> -> vector<16x8xf32>
    %c0_23 = arith.constant 0 : index
    %c0_24 = arith.constant 0 : index
    %48 = vector.load %arg5[%c0_23, %c0_24] : memref<16x1xf32, #tpu.memory_space<vmem>>, vector<16x1xf32>
    %49 = vector.broadcast %48 : vector<16x1xf32> to vector<16x8xf32>
    %50 = arith.addf %47, %49 : vector<16x8xf32>
    %c0_25 = arith.constant 0 : index
    %c0_26 = arith.constant 0 : index
    %51 = vector.load %arg6[%c0_25, %c0_26] : memref<16x8xf32, #tpu.memory_space<vmem>>, vector<16x8xf32>
    tpu.vector_store %arg6[%c0_25, %c0_26], %50 {strides = array<i32>} : memref<16x8xf32, #tpu.memory_space<vmem>>, vector<16x8xf32>,
    return
  }
  func.func @transform_0(%arg0: i32) -> (i32, i32) {
    %c0_i32 = arith.constant 0 : i32
    %c0_i32_0 = arith.constant 0 : i32
    return %c0_i32, %arg0 : i32, i32
  }
  func.func @transform_1(%arg0: i32) -> (i32, i32) {
    %c0_i32 = arith.constant 0 : i32
    %c0_i32_0 = arith.constant 0 : i32
    %c0_i32_1 = arith.constant 0 : i32
    return %c0_i32, %c0_i32_0 : i32, i32
  }
  func.func @transform_2(%arg0: i32) -> (i32, i32) {
    %c0_i32 = arith.constant 0 : i32
    %c0_i32_0 = arith.constant 0 : i32
    %c0_i32_1 = arith.constant 0 : i32
    return %c0_i32, %c0_i32_0 : i32, i32
  }
  func.func @transform_3(%arg0: i32) -> (i32, i32) {
    %c0_i32 = arith.constant 0 : i32
    %c0_i32_0 = arith.constant 0 : i32
    %c0_i32_1 = arith.constant 0 : i32
    return %c0_i32, %c0_i32_0 : i32, i32
  }
  func.func @transform_4(%arg0: i32) -> (i32, i32) {
    %c0_i32 = arith.constant 0 : i32
    %c0_i32_0 = arith.constant 0 : i32
    %c0_i32_1 = arith.constant 0 : i32
    return %c0_i32, %c0_i32_0 : i32, i32
  }
  func.func @transform_5(%arg0: i32) -> (i32, i32) {
    %c0_i32 = arith.constant 0 : i32
    %c0_i32_0 = arith.constant 0 : i32
    return %c0_i32, %arg0 : i32, i32
  }
}

</mosaic_0001>

<llo_original>
// kernel: tpu_custom_call.1
$region0: #{tpu_custom_call.1}
  #allocation0 [shape = 'u32[]', space=smem, size = 0x4, offset = 0x4, fixed_abs, tag = 'smem constant byte address 0x4 - core index']
  #allocation1 [shape = 'u32[144,128]{1,0:T(1,128)}', space=vmem, size = 0x12000, scoped, tag = 'internal scratch']
  %s0 = inlined_call_operand.vmem [shape: f32[16,8], index: 0, kind: input, shape index: {}]
  %s1 = inlined_call_operand.vmem [shape: f32[32,16], index: 1, kind: input, shape index: {}]
  %s2 = inlined_call_operand.vmem [shape: f32[32,1], index: 2, kind: input, shape index: {}]
  %s3 = inlined_call_operand.vmem [shape: f32[16,32], index: 3, kind: input, shape index: {}]
  %s4 = inlined_call_operand.vmem [shape: f32[16,1], index: 4, kind: input, shape index: {}]
  %s5 = inlined_call_operand.vmem [shape: f32[16,8], index: 5, kind: output, shape index: {}]
  %s6 = sld [smem:[#allocation0]]
  $region30: #{tpu_custom_call.1} parent=0
    _
  %s8 = ssub.s32 1, %s6
  %s9 = scalar_select 0, %s8, %s6
  // Predicated region
  $region2: #{tpu_custom_call.1} parent=0 // pred_check
    _
  $region3: #{tpu_custom_call.1} parent=0 // pred_check_branch
    %11 = sbr.rel (0) target = $region5
  $region4: #{tpu_custom_call.1} parent=0 // pred_region
    _
  $region5: #{tpu_custom_call.1} parent=0 // pred_fallthru
    _
  // Predicated region
  $region6: #{tpu_custom_call.1} parent=0 // pred_check
    _
  $region7: #{tpu_custom_call.1} parent=0 // pred_check_branch
    %13 = sbr.rel (0) target = $region9
  $region8: #{tpu_custom_call.1} parent=0 // pred_region
    _
  $region9: #{tpu_custom_call.1} parent=0 // pred_fallthru
    _
  // Predicated region
  $region10: #{tpu_custom_call.1} parent=0 // pred_check
    _
  $region11: #{tpu_custom_call.1} parent=0 // pred_check_branch
    %15 = sbr.rel (0) target = $region13
  $region12: #{tpu_custom_call.1} parent=0 // pred_region
    _
  $region13: #{tpu_custom_call.1} parent=0 // pred_fallthru
    _
  // Predicated region
  $region14: #{tpu_custom_call.1} parent=0 // pred_check
    _
  $region15: #{tpu_custom_call.1} parent=0 // pred_check_branch
    %17 = sbr.rel (0) target = $region17
  $region16: #{tpu_custom_call.1} parent=0 // pred_region
    _
  $region17: #{tpu_custom_call.1} parent=0 // pred_fallthru
    _
  // Predicated region
  $region18: #{tpu_custom_call.1} parent=0 // pred_check
    _
  $region19: #{tpu_custom_call.1} parent=0 // pred_check_branch
    %19 = sbr.rel (0) target = $region21
  $region20: #{tpu_custom_call.1} parent=0 // pred_region
    _
  $region21: #{tpu_custom_call.1} parent=0 // pred_fallthru
    _
  %v20 = vld [vmem:[%s0] sm:$0xff]
  %v21 = vld [vmem:[%s0 + $0x8] sm:$0xff]
  %v22 = vld [vmem:[%s1] sm:$0xff]
  %v23 = vld [vmem:[%s1 + $0x8] sm:$0xff]
  %v24 = vld [vmem:[%s1 + $0x10] sm:$0xff]
  %v25 = vld [vmem:[%s1 + $0x18] sm:$0xff]
  %v26 = vld [vmem:[%s2] sm:$0xff]
  %v27 = vld [vmem:[%s2 + $0x8] sm:$0xff]
  %v28 = vld [vmem:[%s2 + $0x10] sm:$0xff]
  %v29 = vld [vmem:[%s2 + $0x18] sm:$0xff]
  %31 = vset.pattern.permute.xlu0 0
  %32 = vperm.xlu0 %31, %v26
  %v33 = vpop.permute.xlu0 %32
  %36 = vset.pattern.permute.xlu0 0
  %37 = vperm.xlu0 %36, %v27
  %v38 = vpop.permute.xlu0 %37
  %41 = vset.pattern.permute.xlu0 0
  %42 = vperm.xlu0 %41, %v28
  %v43 = vpop.permute.xlu0 %42
  %46 = vset.pattern.permute.xlu0 0
  %47 = vperm.xlu0 %46, %v29
  %v48 = vpop.permute.xlu0 %47
  %vm50 = vcmask 130048
  %v52 = vsel %vm50, %v22, 0
  %v55 = vsel %vm50, %v23, 0
  %v58 = vsel %vm50, %v24, 0
  %v61 = vsel %vm50, %v25, 0
  %63 = vmatprep.subr.mxu0 0.0
  %64 = vmatpush1.msra.mxu0 0.0
  %65 = vmatprep.subr.mxu0 0.0
  %66 = vmatpush1.msra.mxu0 0.0
  %67 = vmatprep.subr.mxu0 0.0
  %68 = vmatpush1.msra.mxu0 0.0
  %69 = vmatprep.subr.mxu0 0.0
  %70 = vmatpush1.msra.mxu0 0.0
  %71 = vmatprep.subr.mxu0 0.0
  %72 = vmatpush1.msra.mxu0 0.0
  %73 = vmatprep.subr.mxu0 0.0
  %74 = vmatpush1.msra.mxu0 0.0
  %75 = vmatprep.subr.mxu0 0.0
  %76 = vmatpush1.msra.mxu0 0.0
  %77 = vmatprep.subr.mxu0 0.0
  %78 = vmatpush1.msra.mxu0 0.0
  %79 = vmatprep.subr.mxu0 0.0
  %80 = vmatpush1.msra.mxu0 0.0
  %81 = vmatprep.subr.mxu0 0.0
  %82 = vmatpush1.msra.mxu0 0.0
  %83 = vmatprep.subr.mxu0 0.0
  %84 = vmatpush1.msra.mxu0 0.0
  %85 = vmatprep.subr.mxu0 0.0
  %86 = vmatpush1.msra.mxu0 0.0
  %87 = vmatprep.subr.mxu0 0.0
  %88 = vmatpush1.msra.mxu0 0.0
  %89 = vmatprep.subr.mxu0 0.0
  %90 = vmatpush1.msra.mxu0 0.0
  %91 = vmatprep.subr.mxu0 0.0
  %92 = vmatpush1.msra.mxu0 %v21
  %93 = vmatprep.subr.mxu0 0.0
  %94 = vmatpush1.msra.mxu0 %v20
  %95 = vmatprep.subr.mxu0 0.0
  %96 = vmatpush2.msra.mxu0 0.0
  %97 = vmatprep.subr.mxu0 0.0
  %98 = vmatpush2.msra.mxu0 0.0
  %99 = vmatprep.subr.mxu0 0.0
  %100 = vmatpush2.msra.mxu0 0.0
  %101 = vmatprep.subr.mxu0 0.0
  %102 = vmatpush2.msra.mxu0 0.0
  %103 = vmatprep.subr.mxu0 0.0
  %104 = vmatpush2.msra.mxu0 0.0
  %105 = vmatprep.subr.mxu0 0.0
  %106 = vmatpush2.msra.mxu0 0.0
  %107 = vmatprep.subr.mxu0 0.0
  %108 = vmatpush2.msra.mxu0 0.0
  %109 = vmatprep.subr.mxu0 0.0
  %110 = vmatpush2.msra.mxu0 0.0
  %111 = vmatprep.subr.mxu0 0.0
  %112 = vmatpush2.msra.mxu0 0.0
  %113 = vmatprep.subr.mxu0 0.0
  %114 = vmatpush2.msra.mxu0 0.0
  %115 = vmatprep.subr.mxu0 0.0
  %116 = vmatpush2.msra.mxu0 0.0
  %117 = vmatprep.subr.mxu0 0.0
  %118 = vmatpush2.msra.mxu0 0.0
  %119 = vmatprep.subr.mxu0 0.0
  %120 = vmatpush2.msra.mxu0 0.0
  %121 = vmatprep.subr.mxu0 0.0
  %122 = vmatpush2.msra.mxu0 0.0
  %123 = vmatprep.subr.mxu0 0.0
  %124 = vmatpush2.msra.mxu0 0.0
  %125 = vmatprep.subr.mxu0 0.0
  %126 = vmatpush2.msra.mxu0 0.0
  %127 = vmatprep.mubr.f32.mxu0 0.0
  %128 = vmatmul.mubr.f32.gmra.mxu0 %v52
  %v129 = vpop.f32.mrf.mxu0
  %v130 = vadd.f32 %v33, %v129
  %v131 = vpop.f32.mrf.mxu0
  %132 = vmatprep.mubr.f32.mxu0 0.0
  %133 = vmatmul.mubr.f32.gmra.mxu0 %v55
  %v134 = vpop.f32.mrf.mxu0
  %v135 = vadd.f32 %v38, %v134
  %v136 = vpop.f32.mrf.mxu0
  %137 = vmatprep.mubr.f32.mxu0 0.0
  %138 = vmatmul.mubr.f32.gmra.mxu0 %v58
  %v139 = vpop.f32.mrf.mxu0
  %v140 = vadd.f32 %v43, %v139
  %v141 = vpop.f32.mrf.mxu0
  %142 = vmatprep.mubr.f32.mxu0 0.0
  %143 = vmatmul.mubr.f32.gmra.mxu0 %v61
  %v144 = vpop.f32.mrf.mxu0
  %v145 = vadd.f32 %v48, %v144
  %v146 = vpop.f32.mrf.mxu0
  %147 = vdwg.mxu0
  %v148 = vmul.f32 %v130, 0.5
  %v149 = vmul.f32 %v135, 0.5
  %v150 = vmul.f32 %v140, 0.5
  %v151 = vmul.f32 %v145, 0.5
  %v152 = vmul.f32 %v130, 0.70710677
  %v153 = vmul.f32 %v135, 0.70710677
  %v154 = vmul.f32 %v140, 0.70710677
  %v155 = vmul.f32 %v145, 0.70710677
  %v156 = vand.u32 2147483647, %v152
  %v157 = vand.u32 2147483647, %v153
  %v158 = vand.u32 2147483647, %v154
  %v159 = vand.u32 2147483647, %v155
  %v160 = vmul.f32 %v156, 0.3275911
  %v161 = vmul.f32 %v157, 0.3275911
  %v162 = vmul.f32 %v158, 0.3275911
  %v163 = vmul.f32 %v159, 0.3275911
  %v164 = vadd.f32 %v160, 1.0
  %v165 = vadd.f32 %v161, 1.0
  %v166 = vadd.f32 %v162, 1.0
  %v167 = vadd.f32 %v163, 1.0
  %v168 = vrcp.pop %v164
  %v169 = vmul.f32 1.0, %v168
  %v170 = vrcp.pop %v165
  %v171 = vmul.f32 1.0, %v170
  %v172 = vrcp.pop %v166
  %v173 = vmul.f32 1.0, %v172
  %v174 = vrcp.pop %v167
  %v175 = vmul.f32 1.0, %v174
  %v176 = vmul.f32 %v169, 1.0614054
  %v177 = vmul.f32 %v171, 1.0614054
  %v178 = vmul.f32 %v173, 1.0614054
  %v179 = vmul.f32 %v175, 1.0614054
  %v180 = vadd.f32 %v176, -1.4531521
  %v181 = vadd.f32 %v177, -1.4531521
  %v182 = vadd.f32 %v178, -1.4531521
  %v183 = vadd.f32 %v179, -1.4531521
  %v184 = vmul.f32 %v180, %v169
  %v185 = vmul.f32 %v181, %v171
  %v186 = vmul.f32 %v182, %v173
  %v187 = vmul.f32 %v183, %v175
  %v188 = vadd.f32 %v184, 1.4214138
  %v189 = vadd.f32 %v185, 1.4214138
  %v190 = vadd.f32 %v186, 1.4214138
  %v191 = vadd.f32 %v187, 1.4214138
  %v192 = vmul.f32 %v188, %v169
  %v193 = vmul.f32 %v189, %v171
  %v194 = vmul.f32 %v190, %v173
  %v195 = vmul.f32 %v191, %v175
  %v196 = vadd.f32 %v192, -0.28449672
  %v197 = vadd.f32 %v193, -0.28449672
  %v198 = vadd.f32 %v194, -0.28449672
  %v199 = vadd.f32 %v195, -0.28449672
  %v200 = vmul.f32 %v196, %v169
  %v201 = vmul.f32 %v197, %v171
  %v202 = vmul.f32 %v198, %v173
  %v203 = vmul.f32 %v199, %v175
  %v204 = vadd.f32 %v200, 0.2548296
  %v205 = vadd.f32 %v201, 0.2548296
  %v206 = vadd.f32 %v202, 0.2548296
  %v207 = vadd.f32 %v203, 0.2548296
  %v208 = vmul.f32 %v204, %v169
  %v209 = vmul.f32 %v205, %v171
  %v210 = vmul.f32 %v206, %v173
  %v211 = vmul.f32 %v207, %v175
  %v212 = vsub.f32 0.0, %v156
  %v213 = vsub.f32 0.0, %v157
  %v214 = vsub.f32 0.0, %v158
  %v215 = vsub.f32 0.0, %v159
  %v216 = vmul.f32 %v212, %v156
  %v217 = vmul.f32 %v213, %v157
  %v218 = vmul.f32 %v214, %v158
  %v219 = vmul.f32 %v215, %v159
  %v220 = vmul.f32 %v216, 1.442695
  %v221 = vpow.pop %v220
  %v222 = vmul.f32 %v217, 1.442695
  %v223 = vpow.pop %v222
  %v224 = vmul.f32 %v218, 1.442695
  %v225 = vpow.pop %v224
  %v226 = vmul.f32 %v219, 1.442695
  %v227 = vpow.pop %v226
  %v228 = vmul.f32 %v208, %v221
  %v229 = vmul.f32 %v209, %v223
  %v230 = vmul.f32 %v210, %v225
  %v231 = vmul.f32 %v211, %v227
  %v232 = vsub.f32 1.0, %v228
  %v233 = vsub.f32 1.0, %v229
  %v234 = vsub.f32 1.0, %v230
  %v235 = vsub.f32 1.0, %v231
  %vm236 = vcmp.ge.f32.partialorder %v152, 0.0
  %vm237 = vcmp.ge.f32.partialorder %v153, 0.0
  %vm238 = vcmp.ge.f32.partialorder %v154, 0.0
  %vm239 = vcmp.ge.f32.partialorder %v155, 0.0
  %v240 = vsub.f32 0.0, %v232
  %v241 = vsub.f32 0.0, %v233
  %v242 = vsub.f32 0.0, %v234
  %v243 = vsub.f32 0.0, %v235
  %v244 = vsel %vm236, %v232, %v240
  %v245 = vsel %vm237, %v233, %v241
  %v246 = vsel %vm238, %v234, %v242
  %v247 = vsel %vm239, %v235, %v243
  %v248 = vadd.f32 %v244, 1.0
  %v249 = vadd.f32 %v245, 1.0
  %v250 = vadd.f32 %v246, 1.0
  %v251 = vadd.f32 %v247, 1.0
  %v252 = vmul.f32 %v148, %v248
  %v253 = vmul.f32 %v149, %v249
  %v254 = vmul.f32 %v150, %v250
  %v255 = vmul.f32 %v151, %v251
  %v256 = vld [vmem:[%s3] sm:$0xff]
  %v257 = vld [vmem:[%s3 + $0x8] sm:$0xff]
  %v258 = vld [vmem:[%s4] sm:$0xff]
  %v259 = vld [vmem:[%s4 + $0x8] sm:$0xff]
  %261 = vset.pattern.permute.xlu0 0
  %262 = vperm.xlu0 %261, %v258
  %v263 = vpop.permute.xlu0 %262
  %266 = vset.pattern.permute.xlu0 0
  %267 = vperm.xlu0 %266, %v259
  %v268 = vpop.permute.xlu0 %267
  %vm270 = vcmask 261120
  %v272 = vsel %vm270, %v256, 0
  %v275 = vsel %vm270, %v257, 0
  %277 = vmatprep.subr.mxu0 0.0
  %278 = vmatpush1.msra.mxu0 0.0
  %279 = vmatprep.subr.mxu0 0.0
  %280 = vmatpush1.msra.mxu0 0.0
  %281 = vmatprep.subr.mxu0 0.0
  %282 = vmatpush1.msra.mxu0 0.0
  %283 = vmatprep.subr.mxu0 0.0
  %284 = vmatpush1.msra.mxu0 0.0
  %285 = vmatprep.subr.mxu0 0.0
  %286 = vmatpush1.msra.mxu0 0.0
  %287 = vmatprep.subr.mxu0 0.0
  %288 = vmatpush1.msra.mxu0 0.0
  %289 = vmatprep.subr.mxu0 0.0
  %290 = vmatpush1.msra.mxu0 0.0
  %291 = vmatprep.subr.mxu0 0.0
  %292 = vmatpush1.msra.mxu0 0.0
  %293 = vmatprep.subr.mxu0 0.0
  %294 = vmatpush1.msra.mxu0 0.0
  %295 = vmatprep.subr.mxu0 0.0
  %296 = vmatpush1.msra.mxu0 0.0
  %297 = vmatprep.subr.mxu0 0.0
  %298 = vmatpush1.msra.mxu0 0.0
  %299 = vmatprep.subr.mxu0 0.0
  %300 = vmatpush1.msra.mxu0 0.0
  %301 = vmatprep.subr.mxu0 0.0
  %302 = vmatpush1.msra.mxu0 %v255
  %303 = vmatprep.subr.mxu0 0.0
  %304 = vmatpush1.msra.mxu0 %v254
  %305 = vmatprep.subr.mxu0 0.0
  %306 = vmatpush1.msra.mxu0 %v253
  %307 = vmatprep.subr.mxu0 0.0
  %308 = vmatpush1.msra.mxu0 %v252
  %309 = vmatprep.subr.mxu0 0.0
  %310 = vmatpush2.msra.mxu0 0.0
  %311 = vmatprep.subr.mxu0 0.0
  %312 = vmatpush2.msra.mxu0 0.0
  %313 = vmatprep.subr.mxu0 0.0
  %314 = vmatpush2.msra.mxu0 0.0
  %315 = vmatprep.subr.mxu0 0.0
  %316 = vmatpush2.msra.mxu0 0.0
  %317 = vmatprep.subr.mxu0 0.0
  %318 = vmatpush2.msra.mxu0 0.0
  %319 = vmatprep.subr.mxu0 0.0
  %320 = vmatpush2.msra.mxu0 0.0
  %321 = vmatprep.subr.mxu0 0.0
  %322 = vmatpush2.msra.mxu0 0.0
  %323 = vmatprep.subr.mxu0 0.0
  %324 = vmatpush2.msra.mxu0 0.0
  %325 = vmatprep.subr.mxu0 0.0
  %326 = vmatpush2.msra.mxu0 0.0
  %327 = vmatprep.subr.mxu0 0.0
  %328 = vmatpush2.msra.mxu0 0.0
  %329 = vmatprep.subr.mxu0 0.0
  %330 = vmatpush2.msra.mxu0 0.0
  %331 = vmatprep.subr.mxu0 0.0
  %332 = vmatpush2.msra.mxu0 0.0
  %333 = vmatprep.subr.mxu0 0.0
  %334 = vmatpush2.msra.mxu0 0.0
  %335 = vmatprep.subr.mxu0 0.0
  %336 = vmatpush2.msra.mxu0 0.0
  %337 = vmatprep.subr.mxu0 0.0
  %338 = vmatpush2.msra.mxu0 0.0
  %339 = vmatprep.subr.mxu0 0.0
  %340 = vmatpush2.msra.mxu0 0.0
  %341 = vmatprep.mubr.f32.mxu0 0.0
  %342 = vmatmul.mubr.f32.gmra.mxu0 %v272
  %v343 = vpop.f32.mrf.mxu0
  %v344 = vadd.f32 %v263, %v343
  %v345 = vpop.f32.mrf.mxu0
  %346 = vmatprep.mubr.f32.mxu0 0.0
  %347 = vmatmul.mubr.f32.gmra.mxu0 %v275
  %v348 = vpop.f32.mrf.mxu0
  %v349 = vadd.f32 %v268, %v348
  %v350 = vpop.f32.mrf.mxu0
  %351 = vdwg.mxu0
  %vm352 = vcmask 64512
  %353 = vst.msk [vmem:[%s5] sm:$0xff] %vm352, %v344
  %354 = vst.msk [vmem:[%s5 + $0x8] sm:$0xff] %vm352, %v349
  // Predicated region
  $region22: #{tpu_custom_call.1} parent=0 // pred_check
    _
  $region23: #{tpu_custom_call.1} parent=0 // pred_check_branch
    %356 = sbr.rel (0) target = $region25
  $region24: #{tpu_custom_call.1} parent=0 // pred_region
    _
  $region25: #{tpu_custom_call.1} parent=0 // pred_fallthru
    _
  // Predicated region
  $region26: #{tpu_custom_call.1} parent=0 // pred_check
    _
  $region27: #{tpu_custom_call.1} parent=0 // pred_check_branch
    %358 = sbr.rel (0) target = $region29
  $region28: #{tpu_custom_call.1} parent=0 // pred_region
    _
  $region29: #{tpu_custom_call.1} parent=0 // pred_fallthru
    _

</llo_original>
